<compile_context>
chip_gen: v7x
topology: tpu7x:2x2x1
jax: 0.10.0
libtpu: 0.0.40
codegen_flags: <defaults>
</compile_context>

<pallas_src>
import math

import jax
import jax.numpy as jnp
from jax import lax
from jax.experimental import pallas as pl
from jax.experimental.pallas import tpu as pltpu

NUM_HEADS = 8  # stands in for CUR_MODEL.byt5config.num_heads


def _get_slopes(n):
    """ALiBi head slopes, identical to the PyTorch reference."""
    def get_slopes_power_of_2(n):
        start = 2 ** (-2 ** (-(math.log2(n) - 3)))
        ratio = start
        return [start * ratio ** i for i in range(n)]

    if math.log2(n).is_integer():
        return get_slopes_power_of_2(n)
    closest_power_of_2 = 2 ** math.floor(math.log2(n))
    return (get_slopes_power_of_2(closest_power_of_2)
            + _get_slopes(2 * closest_power_of_2)[0::2][: n - closest_power_of_2])


def _round_up(x, m):
    return ((x + m - 1) // m) * m


def _select_caps():
    """Generation-aware tile caps (in elements) and optional VMEM limit."""
    tq_cap, tk_cap, vmem_limit = 512, 1024, None       # ~2 MiB f32 tile (v5e/v6e)
    try:
        kind = jax.devices()[0].device_kind.lower()
        if "v7" in kind or "7x" in kind:
            # v7x: 3.2 TB/s HBM makes the ~0.35 us/step overhead visible; an
            # ~8 MiB f32 tile double-buffered (~16 MiB) fits comfortably under
            # an explicit 48 MiB scoped-VMEM limit (64 MiB physical per TC).
            tq_cap, tk_cap = 1024, 2048
            vmem_limit = 48 * 1024 * 1024
    except Exception:
        pass
    return tq_cap, tk_cap, vmem_limit


def _alibi_kernel(slopes_ref, o_ref):
    # slopes_ref: VMEM (BH, 1, 1) f32 ; o_ref: VMEM (BH, TQ, TK) output tile.
    _, tq, tk = o_ref.shape
    q0 = pl.program_id(1) * tq
    k0 = pl.program_id(2) * tk

    # int32 iotas + scalar tile offsets (exact for any seq length); the
    # subtraction broadcasts (TQ,1)-(1,TK) -> (TQ,TK).
    q_pos = lax.broadcasted_iota(jnp.int32, (tq, 1), 0) + q0
    k_pos = lax.broadcasted_iota(jnp.int32, (1, tk), 1) + k0
    rel = (q_pos - k_pos).astype(jnp.float32)

    biased = rel * jnp.where(rel > 0, -0.5, 2.0)              # (TQ, TK) f32
    o_ref[...] = (slopes_ref[...] * biased[None, :, :]).astype(o_ref.dtype)


def alibi_positional_encoding(query_length, key_length, num_heads=NUM_HEADS,
                              dtype=jnp.float32):
    dtype = jnp.dtype(dtype)
    slopes = jnp.asarray(_get_slopes(num_heads), dtype=jnp.float32)
    slopes = slopes.reshape(num_heads, 1, 1)

    q_align = max(8, 32 // dtype.itemsize)      # 8 f32 / 16 bf16 / 32 int8
    tq_cap, tk_cap, vmem_limit = _select_caps()

    q_t = _round_up(query_length, q_align)
    k_t = _round_up(key_length, 128)

    # Small-shape path: whole (H, Q, K) bias in a single grid step.
    tile_budget_bytes = tq_cap * tk_cap * 4
    if num_heads * q_t * k_t * dtype.itemsize <= tile_budget_bytes:
        bh, tq, tk = num_heads, q_t, k_t
    else:
        bh = 1
        tq = min(q_t, tq_cap)
        tk = min(k_t, tk_cap)

    grid = (num_heads // bh,
            pl.cdiv(query_length, tq),
            pl.cdiv(key_length, tk))

    cp_kwargs = dict(dimension_semantics=("parallel", "parallel", "parallel"))
    if vmem_limit is not None:
        cp_kwargs["vmem_limit_bytes"] = vmem_limit

    out = pl.pallas_call(
        _alibi_kernel,
        out_shape=jax.ShapeDtypeStruct(
            (num_heads, query_length, key_length), dtype),
        grid=grid,
        in_specs=[pl.BlockSpec((bh, 1, 1), lambda h, i, j: (h, 0, 0))],
        out_specs=pl.BlockSpec((bh, tq, tk), lambda h, i, j: (h, i, j)),
        compiler_params=pltpu.CompilerParams(**cp_kwargs),
    )(slopes)

    # PyTorch returns [1, H, Q, K]
    return out[None, ...]


def _reference(query_length, key_length, num_heads=NUM_HEADS):
    """Pure-JAX reference mirroring the PyTorch code."""
    ctx = jnp.arange(query_length)[:, None]
    mem = jnp.arange(key_length)[None, :]
    rel = (ctx - mem).astype(jnp.float32)
    lr = jnp.where(rel > 0, -0.5, 2.0)
    rel = rel * lr
    slopes = jnp.asarray(_get_slopes(num_heads), jnp.float32).reshape(
        1, num_heads, 1, 1)
    return slopes * rel[None, None, :, :]


if __name__ == "__main__":
    # No tensor inputs to this module (it takes sequence lengths); key is
    # created only to satisfy the deterministic-input convention.
    _ = jax.random.PRNGKey(0)

    # (8, 16): small-shape single-step path (matches the module's tiny default)
    # (1040, 272): multi-tile path exercising tile offsets + masked Q/K edges.
    for (q_len, k_len) in [(8, 16), (1040, 272)]:
        out = jax.block_until_ready(
            alibi_positional_encoding(q_len, k_len, NUM_HEADS))
        ref = _reference(q_len, k_len, NUM_HEADS)
        assert out.shape == (1, NUM_HEADS, q_len, k_len), out.shape
        assert jnp.allclose(out, ref, atol=1e-5), \
            f"f32 mismatch vs reference at (Q={q_len}, K={k_len})"

    # bf16 output path (store-bound kernel -> halves bytes written).
    out_bf16 = jax.block_until_ready(
        alibi_positional_encoding(1040, 272, NUM_HEADS, dtype=jnp.bfloat16))
    ref = _reference(1040, 272, NUM_HEADS)
    assert out_bf16.dtype == jnp.bfloat16
    assert jnp.allclose(out_bf16.astype(jnp.float32), ref,
                        rtol=1e-2, atol=1e-2), "bf16 mismatch vs reference"

    print("KERNEL_OK")
</pallas_src>

<mosaic_0001>
module attributes {stable_mosaic.version = 11 : i64} {
  func.func @_alibi_kernel(%arg0: i32, %arg1: i32, %arg2: i32, %arg3: memref<8x1x1xf32, #tpu.memory_space<vmem>>, %arg4: memref<8x8x128xf32, #tpu.memory_space<vmem>>) attributes {dimension_semantics = [#tpu.dimension_semantics<parallel>, #tpu.dimension_semantics<parallel>, #tpu.dimension_semantics<parallel>], iteration_bounds = array<i64: 1, 1, 1>, scalar_prefetch = 0 : i64, scratch_operands = 0 : i64, tpu.core_type = #tpu.core_type<tc>, window_params = [{transform_indices = @transform_0, window_bounds = array<i64: 8, 1, 1>}, {transform_indices = @transform_1, window_bounds = array<i64: 8, 8, 128>}]} {
    %c8_i32 = arith.constant 8 : i32
    %0 = arith.muli %arg1, %c8_i32 : i32
    %c128_i32 = arith.constant 128 : i32
    %1 = arith.muli %arg2, %c128_i32 : i32
    %2 = tpu.iota {dimensions = array<i32: 0>} : vector<8x1xi32>
    %3 = vector.broadcast %0 : i32 to vector<8x1xi32>
    %4 = arith.addi %2, %3 : vector<8x1xi32>
    %5 = tpu.iota {dimensions = array<i32: 1>} : vector<1x128xi32>
    %6 = vector.broadcast %1 : i32 to vector<1x128xi32>
    %7 = arith.addi %5, %6 : vector<1x128xi32>
    %8 = vector.broadcast %4 : vector<8x1xi32> to vector<8x128xi32>
    %9 = vector.broadcast %7 : vector<1x128xi32> to vector<8x128xi32>
    %10 = arith.subi %8, %9 : vector<8x128xi32>
    %11 = arith.sitofp %10 : vector<8x128xi32> to vector<8x128xf32>
    %cst = arith.constant 0.000000e+00 : f32
    %12 = vector.broadcast %cst : f32 to vector<8x128xf32>
    %13 = arith.cmpf ogt, %11, %12 : vector<8x128xf32>
    %cst_0 = arith.constant -5.000000e-01 : f32
    %cst_1 = arith.constant 2.000000e+00 : f32
    %14 = vector.broadcast %cst_0 : f32 to vector<8x128xf32>
    %15 = vector.broadcast %cst_1 : f32 to vector<8x128xf32>
    %16 = arith.select %13, %14, %15 : vector<8x128xi1>, vector<8x128xf32>
    %17 = arith.mulf %11, %16 : vector<8x128xf32>
    %c0 = arith.constant 0 : index
    %c0_2 = arith.constant 0 : index
    %c0_3 = arith.constant 0 : index
    %18 = vector.load %arg3[%c0, %c0_2, %c0_3] : memref<8x1x1xf32, #tpu.memory_space<vmem>>, vector<8x1x1xf32>
    %19 = vector.shape_cast %17 : vector<8x128xf32> to vector<1x8x128xf32>
    %20 = vector.broadcast %18 : vector<8x1x1xf32> to vector<8x8x128xf32>
    %21 = vector.broadcast %19 : vector<1x8x128xf32> to vector<8x8x128xf32>
    %22 = arith.mulf %20, %21 : vector<8x8x128xf32>
    %c0_4 = arith.constant 0 : index
    %c0_5 = arith.constant 0 : index
    %c0_6 = arith.constant 0 : index
    %23 = vector.load %arg4[%c0_4, %c0_5, %c0_6] : memref<8x8x128xf32, #tpu.memory_space<vmem>>, vector<8x8x128xf32>
    tpu.vector_store %arg4[%c0_4, %c0_5, %c0_6], %22 {strides = array<i32>} : memref<8x8x128xf32, #tpu.memory_space<vmem>>, vector<8x8x128xf32>,
    return
  }
  func.func @transform_0(%arg0: i32, %arg1: i32, %arg2: i32) -> (i32, i32, i32) {
    %c0_i32 = arith.constant 0 : i32
    %c0_i32_0 = arith.constant 0 : i32
    %c0_i32_1 = arith.constant 0 : i32
    return %arg0, %c0_i32, %c0_i32_0 : i32, i32, i32
  }
  func.func @transform_1(%arg0: i32, %arg1: i32, %arg2: i32) -> (i32, i32, i32) {
    %c0_i32 = arith.constant 0 : i32
    return %arg0, %arg1, %arg2 : i32, i32, i32
  }
}

</mosaic_0001>

<llo_original>
// kernel: tpu_custom_call.1
$region0: #{tpu_custom_call.1}
  #allocation0 [shape = 'u32[]', space=smem, size = 0x4, offset = 0x4, fixed_abs, tag = 'smem constant byte address 0x4 - core index']
  #allocation1 [shape = 'u32[144,128]{1,0:T(1,128)}', space=vmem, size = 0x12000, scoped, tag = 'internal scratch']
  %s0 = inlined_call_operand.vmem [shape: f32[8,1,1], index: 0, kind: input, shape index: {}]
  %s1 = inlined_call_operand.hbm [shape: f32[8,8,16], index: 1, kind: output, shape index: {}]
  %s2 = sld [smem:[#allocation0]]
  $region14: #{tpu_custom_call.1} parent=0
    _
  %s4 = ssub.s32 1, %s2
  %s5 = scalar_select 0, %s4, %s2
  $region1: #{tpu_custom_call.1} parent=0
    #allocation2 [shape = 'u8[32768]{0}', space=vmem, size = 0x8000, scoped, tag = 'output window, operand 0, single buffered']
    #allocation3 [shape = 's32[1]{0}', space=sflag, size = 0x4, scoped, tag = 'scoped memory for tpu_custom_call.1']
    %6 = vsyncpa [#allocation3], 0
    // Predicated region
    $region2: #{tpu_custom_call.1} parent=1 // pred_check
      _
    $region3: #{tpu_custom_call.1} parent=1 // pred_check_branch
      %8 = sbr.rel (0) target = $region5
    $region4: #{tpu_custom_call.1} parent=1 // pred_region
      _
    $region5: #{tpu_custom_call.1} parent=1 // pred_fallthru
      _
    %s9 = smul.u32 0, 8
    %s10 = smul.u32 0, 128
    %v11 = vlaneseq
    %v12 = vshrl.u32 %v11, 7
    %v13 = vstv %s9
    %v14 = vadd.s32 %v12, %v13
    %v15 = vlaneseq
    %v16 = vand.u32 %v15, 127
    %v17 = vstv %s10
    %v18 = vadd.s32 %v16, %v17
    %v19 = vsub.s32 %v14, %v18
    %v20 = vcvt.s32.f32 %v19
    %vm21 = vcmp.gt.f32.partialorder %v20, 0.0
    %v22 = vsel %vm21, -0.5, 2.0
    %v23 = vmul.f32 %v20, %v22
    %v24 = vld [vmem:[%s0] sm:$0x1]
    %v25 = vld [vmem:[%s0 + $0x1] sm:$0x1]
    %v26 = vld [vmem:[%s0 + $0x2] sm:$0x1]
    %v27 = vld [vmem:[%s0 + $0x3] sm:$0x1]
    %v28 = vld [vmem:[%s0 + $0x4] sm:$0x1]
    %v29 = vld [vmem:[%s0 + $0x5] sm:$0x1]
    %v30 = vld [vmem:[%s0 + $0x6] sm:$0x1]
    %v31 = vld [vmem:[%s0 + $0x7] sm:$0x1]
    %v40 = vlaneseq
    %v41 = vshrl.u32 %v40, 7
    %v42 = vsub.s32 0, %v41
    %v43 = vrot.slane %v24, %v42
    %v44 = vlaneseq
    %v45 = vshrl.u32 %v44, 7
    %v46 = vsub.s32 0, %v45
    %v47 = vrot.slane %v25, %v46
    %v48 = vlaneseq
    %v49 = vshrl.u32 %v48, 7
    %v50 = vsub.s32 0, %v49
    %v51 = vrot.slane %v26, %v50
    %v52 = vlaneseq
    %v53 = vshrl.u32 %v52, 7
    %v54 = vsub.s32 0, %v53
    %v55 = vrot.slane %v27, %v54
    %v56 = vlaneseq
    %v57 = vshrl.u32 %v56, 7
    %v58 = vsub.s32 0, %v57
    %v59 = vrot.slane %v28, %v58
    %v60 = vlaneseq
    %v61 = vshrl.u32 %v60, 7
    %v62 = vsub.s32 0, %v61
    %v63 = vrot.slane %v29, %v62
    %v64 = vlaneseq
    %v65 = vshrl.u32 %v64, 7
    %v66 = vsub.s32 0, %v65
    %v67 = vrot.slane %v30, %v66
    %v68 = vlaneseq
    %v69 = vshrl.u32 %v68, 7
    %v70 = vsub.s32 0, %v69
    %v71 = vrot.slane %v31, %v70
    %72 = vset.pattern.permute.xlu0 0
    %73 = vperm.xlu0 %72, %v43
    %v74 = vpop.permute.xlu0 %73
    %76 = vset.pattern.permute.xlu0 0
    %77 = vperm.xlu0 %76, %v47
    %v78 = vpop.permute.xlu0 %77
    %80 = vset.pattern.permute.xlu0 0
    %81 = vperm.xlu0 %80, %v51
    %v82 = vpop.permute.xlu0 %81
    %84 = vset.pattern.permute.xlu0 0
    %85 = vperm.xlu0 %84, %v55
    %v86 = vpop.permute.xlu0 %85
    %88 = vset.pattern.permute.xlu0 0
    %89 = vperm.xlu0 %88, %v59
    %v90 = vpop.permute.xlu0 %89
    %92 = vset.pattern.permute.xlu0 0
    %93 = vperm.xlu0 %92, %v63
    %v94 = vpop.permute.xlu0 %93
    %96 = vset.pattern.permute.xlu0 0
    %97 = vperm.xlu0 %96, %v67
    %v98 = vpop.permute.xlu0 %97
    %100 = vset.pattern.permute.xlu0 0
    %101 = vperm.xlu0 %100, %v71
    %v102 = vpop.permute.xlu0 %101
    %v104 = vmul.f32 %v74, %v23
    %v105 = vmul.f32 %v78, %v23
    %v106 = vmul.f32 %v82, %v23
    %v107 = vmul.f32 %v86, %v23
    %v108 = vmul.f32 %v90, %v23
    %v109 = vmul.f32 %v94, %v23
    %v110 = vmul.f32 %v98, %v23
    %v111 = vmul.f32 %v102, %v23
    %112 = vst [vmem:[#allocation2] sm:$0xff] %v104
    %113 = vst [vmem:[#allocation2 + $0x8] sm:$0xff] %v105
    %114 = vst [vmem:[#allocation2 + $0x10] sm:$0xff] %v106
    %115 = vst [vmem:[#allocation2 + $0x18] sm:$0xff] %v107
    %116 = vst [vmem:[#allocation2 + $0x20] sm:$0xff] %v108
    %117 = vst [vmem:[#allocation2 + $0x28] sm:$0xff] %v109
    %118 = vst [vmem:[#allocation2 + $0x30] sm:$0xff] %v110
    %119 = vst [vmem:[#allocation2 + $0x38] sm:$0xff] %v111
    // Predicated region
    $region6: #{tpu_custom_call.1} parent=1 // pred_check
      _
    $region7: #{tpu_custom_call.1} parent=1 // pred_check_branch
      %121 = sbr.rel (0) target = $region9
    $region8: #{tpu_custom_call.1} parent=1 // pred_region
      %s123 = ssub.s32 1024, 1024
      %124 = vsyncadd [#allocation3], %s123
      %s125 = sshll.u32 [#allocation2], 4
      %s126 = int_to_ptr.vmem [resolvable:$true] %s125
      %131 = dma.vmem_to_hbm [thread:$0]  %s126, 1024, %s1, [#allocation3], 128, 128, 8
    $region9: #{tpu_custom_call.1} parent=1 // pred_fallthru
      _
    // Predicated region
    $region10: #{tpu_custom_call.1} parent=1 // pred_check
      _
    $region11: #{tpu_custom_call.1} parent=1 // pred_check_branch
      %133 = sbr.rel (0) target = $region13
    $region12: #{tpu_custom_call.1} parent=1 // pred_region
      %134 = dma.done [#allocation3], 1024
    $region13: #{tpu_custom_call.1} parent=1 // pred_fallthru
      _
    %135 = vsyncpa [#allocation3], 1

</llo_original>
